<compile_context>
chip_gen: v7x
topology: tpu7x:2x2x1
jax: 0.10.0
libtpu: 0.0.40
codegen_flags: <defaults>
</compile_context>

<pallas_src>
import jax
import jax.numpy as jnp
from jax.experimental import pallas as pl
from jax.experimental.pallas import tpu as pltpu


def _round_up(n, m):
    return ((n + m - 1) // m) * m


def _model_kernel(x_ref, w1_ref, b1_ref, sw_ref, b2_ref, out_ref):
    # hidden = relu(x @ W1 - b1)          (MXU + VPU); batch rows are packed
    # G-per-sublane-row, weights are block-diagonal, so this is a plain matmul.
    pre = jnp.dot(x_ref[...], w1_ref[...], preferred_element_type=jnp.float32)
    h = jnp.maximum(pre - b1_ref[...], 0.0)

    # x_out = relu(.) @ (Sstack * W2) + b2   (second MXU matmul, SW pre-folded
    # in the wrapper; valid because Sstack >= 0 lets ReLU commute past it).
    x_out = jnp.dot(h.astype(sw_ref.dtype), sw_ref[...],
                    preferred_element_type=jnp.float32) + b2_ref[...]

    # labelstack = sigmoid(x_out) -- lane-dense (G*K wide) unmasked store.
    out_ref[...] = jax.nn.sigmoid(x_out).astype(out_ref.dtype)


def model_forward(x, W1, b1, W2, b2, parameter, num_samps_for_switch, key,
                  *, block_b=8192, matmul_dtype=jnp.float32):
    """Reproduces Model.forward; returns (labelstack [B, K], phi [H])."""
    B, D = x.shape
    H = W1.shape[1]
    K = int(num_samps_for_switch)

    # ---------------- plain-JAX glue (once per call, not per tile) -----------
    phi = jax.nn.softplus(parameter)                                     # [H]
    conc = jnp.broadcast_to(phi[:, None], (H, K))
    gamma_samps = jax.random.gamma(key, conc)                            # [H, K]
    col_sum = jnp.sum(gamma_samps, axis=0, keepdims=True)
    # eps guard: exact no-op for any nonzero column sum, avoids 0/0 -> NaN.
    Sstack = gamma_samps / jnp.maximum(col_sum, jnp.finfo(jnp.float32).tiny)

    # Fold W2 into the sample matrix once (grid-invariant).
    SW = Sstack * jnp.reshape(jnp.squeeze(W2), (H, 1)).astype(jnp.float32)  # [H, K]

    # ---------------- lane-dense batch packing -------------------------------
    # Pack G consecutive batch rows per slab row so the kernel's input/output
    # lane widths become G*D / G*K (>=128 for the demo shapes).  The HBM-side
    # reshapes are free (row-major); the weights become block-diagonal.
    G = min(8, max(1, 128 // K))
    while G > 1 and (B % G) != 0:
        G //= 2
    n_rows = B // G

    xp = x.reshape(n_rows, G * D)

    eye = jnp.eye(G, dtype=jnp.float32)
    W1p = jnp.einsum('ab,dh->adbh', eye, W1.astype(jnp.float32)).reshape(G * D, G * H)
    SWp = jnp.einsum('ab,hk->ahbk', eye, SW).reshape(G * H, G * K)
    b1p = jnp.tile(jnp.reshape(b1, (-1,)).astype(jnp.float32), G).reshape(1, G * H)
    b2_vec = jnp.broadcast_to(jnp.reshape(b2, (-1,)).astype(jnp.float32), (K,))
    b2p = jnp.tile(b2_vec, G).reshape(1, G * K)

    # Optional bf16 input streams for production sizes (accumulation stays f32).
    xp_m = xp.astype(matmul_dtype)
    W1p_m = W1p.astype(matmul_dtype)
    SWp_m = SWp.astype(matmul_dtype)

    # ---------------- batch tiling --------------------------------------------
    # Large tile to amortize per-step overhead, capped so the (x + out) tiles
    # stay ~<= 4 MiB (well under the 16/32 MiB default scoped-VMEM limits even
    # double-buffered).  No padding: the last block may be partial.
    row_bytes = G * (D * jnp.dtype(matmul_dtype).itemsize + K * 4)
    max_rows_by_vmem = max(8, (4 * 1024 * 1024) // max(1, row_bytes))
    tbp_target = max(1, min(block_b // G, max_rows_by_vmem))
    if n_rows <= tbp_target:
        # Whole batch fits one tile; split in two when big enough so both v7x
        # TensorCores get work (harmless no-op on v5e/v6e).
        tbp = _round_up(pl.cdiv(n_rows, 2), 8) if n_rows >= 16 else n_rows
    else:
        tbp = _round_up(tbp_target, 8)
    grid_b = pl.cdiv(n_rows, tbp)

    # NOTE(v7x, scaled H/K): the replicated W1p/SWp blocks are double-buffered
    # every step; at large H,K single-buffer them (pipeline_mode=pl.Buffered(1))
    # or add a K grid axis to respect the 64 MiB VMEM.
    out_packed = pl.pallas_call(
        _model_kernel,
        out_shape=jax.ShapeDtypeStruct((n_rows, G * K), jnp.float32),
        grid=(grid_b,),
        in_specs=[
            pl.BlockSpec((tbp, G * D), lambda i: (i, 0)),     # x (packed, tiled)
            pl.BlockSpec((G * D, G * H), lambda i: (0, 0)),   # W1 (block-diag)
            pl.BlockSpec((1, G * H), lambda i: (0, 0)),       # b1 (tiled G times)
            pl.BlockSpec((G * H, G * K), lambda i: (0, 0)),   # Sstack*W2 (block-diag)
            pl.BlockSpec((1, G * K), lambda i: (0, 0)),       # b2 (tiled G times)
        ],
        out_specs=pl.BlockSpec((tbp, G * K), lambda i: (i, 0)),
        compiler_params=pltpu.CompilerParams(
            dimension_semantics=("parallel",),
            vmem_limit_bytes=32 * 1024 * 1024,
        ),
    )(xp_m, W1p_m, b1p, SWp_m, b2p)

    labelstack = out_packed.reshape(B, K)   # free row-major unpacking
    return labelstack, phi


if __name__ == "__main__":
    B, D, H, K = 8, 16, 32, 16   # batch, input_dim, hidden_dim, num_samps_for_switch

    key = jax.random.PRNGKey(0)
    kx, kw1, kb1, kw2, kb2, kgamma = jax.random.split(key, 6)

    x = jax.random.normal(kx, (B, D), jnp.float32)
    W1 = jax.random.normal(kw1, (D, H), jnp.float32) * 0.1
    b1 = jax.random.normal(kb1, (H,), jnp.float32) * 0.1
    W2 = jax.random.normal(kw2, (H, 1), jnp.float32) * 0.1
    b2 = jax.random.normal(kb2, (1,), jnp.float32) * 0.1
    parameter = -1e-10 * jnp.ones((H,), jnp.float32)   # matches nn.Parameter init

    labelstack, phi = model_forward(x, W1, b1, W2, b2, parameter, K, kgamma)
    jax.block_until_ready((labelstack, phi))

    # Pure-JAX reference: the original un-fused formulation, built from
    # elementwise ops (no XLA dots) so it is f32-exact and independent of MXU
    # matmul precision.  Same key -> identical Gamma draws.
    phi_ref = jax.nn.softplus(parameter)
    gamma_samps = jax.random.gamma(kgamma, jnp.broadcast_to(phi_ref[:, None], (H, K)))
    col_sum = jnp.sum(gamma_samps, axis=0, keepdims=True)
    Sstack = gamma_samps / jnp.maximum(col_sum, jnp.finfo(jnp.float32).tiny)
    shifted = jnp.sum(x[:, :, None] * W1[None, :, :], axis=1) - b1          # [B, H]
    x_samps = jax.nn.relu(shifted[:, :, None] * Sstack[None, :, :])         # [B, H, K]
    x_out = jnp.sum(x_samps * jnp.squeeze(W2)[None, :, None], axis=1) + b2  # [B, K]
    ref = jax.nn.sigmoid(x_out)

    assert labelstack.shape == (B, K) and phi.shape == (H,)
    err = float(jnp.max(jnp.abs(labelstack - ref)))
    assert err < 1e-3, f"max|labelstack - ref| = {err}"
    assert bool(jnp.allclose(phi, phi_ref, atol=1e-6))
    print("KERNEL_OK")
</pallas_src>

<mosaic_0001>
module attributes {stable_mosaic.version = 11 : i64} {
  func.func @_model_kernel(%arg0: i32, %arg1: memref<1x128xf32, #tpu.memory_space<vmem>>, %arg2: memref<128x256xf32, #tpu.memory_space<vmem>>, %arg3: memref<1x256xf32, #tpu.memory_space<vmem>>, %arg4: memref<256x128xf32, #tpu.memory_space<vmem>>, %arg5: memref<1x128xf32, #tpu.memory_space<vmem>>, %arg6: memref<1x128xf32, #tpu.memory_space<vmem>>) attributes {dimension_semantics = [#tpu.dimension_semantics<parallel>], iteration_bounds = array<i64: 1>, scalar_prefetch = 0 : i64, scratch_operands = 0 : i64, tpu.core_type = #tpu.core_type<tc>, window_params = [{transform_indices = @transform_0, window_bounds = array<i64: 1, 128>}, {pipeline_mode = #tpu.pipeline_mode<synchronous>, transform_indices = @transform_1, window_bounds = array<i64: 128, 256>}, {pipeline_mode = #tpu.pipeline_mode<synchronous>, transform_indices = @transform_2, window_bounds = array<i64: 1, 256>}, {pipeline_mode = #tpu.pipeline_mode<synchronous>, transform_indices = @transform_3, window_bounds = array<i64: 256, 128>}, {pipeline_mode = #tpu.pipeline_mode<synchronous>, transform_indices = @transform_4, window_bounds = array<i64: 1, 128>}, {transform_indices = @transform_5, window_bounds = array<i64: 1, 128>}]} {
    %c0 = arith.constant 0 : index
    %c0_0 = arith.constant 0 : index
    %0 = vector.load %arg1[%c0, %c0_0] : memref<1x128xf32, #tpu.memory_space<vmem>>, vector<1x128xf32>
    %c0_1 = arith.constant 0 : index
    %c0_2 = arith.constant 0 : index
    %1 = vector.load %arg2[%c0_1, %c0_2] : memref<128x256xf32, #tpu.memory_space<vmem>>, vector<128x256xf32>
    %cst = arith.constant dense<0.000000e+00> : vector<1x256xf32>
    %2 = tpu.matmul %0, %1, %cst {dimension_numbers = #tpu.dot_dimension_numbers<[1], [0], [0], [1], [0, 0, 1, 1], [], []>} : vector<1x128xf32>, vector<128x256xf32>, vector<1x256xf32> -> vector<1x256xf32>
    %c0_3 = arith.constant 0 : index
    %c0_4 = arith.constant 0 : index
    %3 = vector.load %arg3[%c0_3, %c0_4] : memref<1x256xf32, #tpu.memory_space<vmem>>, vector<1x256xf32>
    %4 = arith.subf %2, %3 : vector<1x256xf32>
    %cst_5 = arith.constant 0.000000e+00 : f32
    %5 = vector.broadcast %cst_5 : f32 to vector<1x256xf32>
    %6 = arith.maximumf %4, %5 : vector<1x256xf32>
    %c0_6 = arith.constant 0 : index
    %c0_7 = arith.constant 0 : index
    %7 = vector.load %arg4[%c0_6, %c0_7] : memref<256x128xf32, #tpu.memory_space<vmem>>, vector<256x128xf32>
    %cst_8 = arith.constant dense<0.000000e+00> : vector<1x128xf32>
    %8 = tpu.matmul %6, %7, %cst_8 {dimension_numbers = #tpu.dot_dimension_numbers<[1], [0], [0], [1], [0, 0, 1, 1], [], []>} : vector<1x256xf32>, vector<256x128xf32>, vector<1x128xf32> -> vector<1x128xf32>
    %c0_9 = arith.constant 0 : index
    %c0_10 = arith.constant 0 : index
    %9 = vector.load %arg5[%c0_9, %c0_10] : memref<1x128xf32, #tpu.memory_space<vmem>>, vector<1x128xf32>
    %10 = arith.addf %8, %9 : vector<1x128xf32>
    %11 = arith.negf %10 : vector<1x128xf32>
    %12 = math.exp %11 : vector<1x128xf32>
    %cst_11 = arith.constant 1.000000e+00 : f32
    %13 = vector.broadcast %cst_11 : f32 to vector<1x128xf32>
    %14 = arith.addf %13, %12 : vector<1x128xf32>
    %15 = arith.divf %13, %14 : vector<1x128xf32>
    %c0_12 = arith.constant 0 : index
    %c0_13 = arith.constant 0 : index
    %16 = vector.load %arg6[%c0_12, %c0_13] : memref<1x128xf32, #tpu.memory_space<vmem>>, vector<1x128xf32>
    tpu.vector_store %arg6[%c0_12, %c0_13], %15 {strides = array<i32>} : memref<1x128xf32, #tpu.memory_space<vmem>>, vector<1x128xf32>,
    return
  }
  func.func @transform_0(%arg0: i32) -> (i32, i32) {
    %c0_i32 = arith.constant 0 : i32
    %c0_i32_0 = arith.constant 0 : i32
    return %arg0, %c0_i32 : i32, i32
  }
  func.func @transform_1(%arg0: i32) -> (i32, i32) {
    %c0_i32 = arith.constant 0 : i32
    %c0_i32_0 = arith.constant 0 : i32
    %c0_i32_1 = arith.constant 0 : i32
    return %c0_i32, %c0_i32_0 : i32, i32
  }
  func.func @transform_2(%arg0: i32) -> (i32, i32) {
    %c0_i32 = arith.constant 0 : i32
    %c0_i32_0 = arith.constant 0 : i32
    %c0_i32_1 = arith.constant 0 : i32
    return %c0_i32, %c0_i32_0 : i32, i32
  }
  func.func @transform_3(%arg0: i32) -> (i32, i32) {
    %c0_i32 = arith.constant 0 : i32
    %c0_i32_0 = arith.constant 0 : i32
    %c0_i32_1 = arith.constant 0 : i32
    return %c0_i32, %c0_i32_0 : i32, i32
  }
  func.func @transform_4(%arg0: i32) -> (i32, i32) {
    %c0_i32 = arith.constant 0 : i32
    %c0_i32_0 = arith.constant 0 : i32
    %c0_i32_1 = arith.constant 0 : i32
    return %c0_i32, %c0_i32_0 : i32, i32
  }
  func.func @transform_5(%arg0: i32) -> (i32, i32) {
    %c0_i32 = arith.constant 0 : i32
    %c0_i32_0 = arith.constant 0 : i32
    return %arg0, %c0_i32 : i32, i32
  }
}

</mosaic_0001>

<llo_original>
// kernel: tpu_custom_call.1
$region0: #{tpu_custom_call.1}
  #allocation0 [shape = 'u32[]', space=smem, size = 0x4, offset = 0x4, fixed_abs, tag = 'smem constant byte address 0x4 - core index']
  #allocation1 [shape = 'u32[144,128]{1,0:T(1,128)}', space=vmem, size = 0x12000, scoped, tag = 'internal scratch']
  %s0 = inlined_call_operand.hbm [shape: f32[1,128], index: 0, kind: input, shape index: {}]
  %s1 = inlined_call_operand.hbm [shape: f32[128,256], index: 1, kind: input, shape index: {}]
  %s2 = inlined_call_operand.vmem [shape: f32[1,256], index: 2, kind: input, shape index: {}]
  %s3 = inlined_call_operand.hbm [shape: f32[256,128], index: 3, kind: input, shape index: {}]
  %s4 = inlined_call_operand.vmem [shape: f32[1,128], index: 4, kind: input, shape index: {}]
  %s5 = inlined_call_operand.hbm [shape: f32[1,128], index: 5, kind: output, shape index: {}]
  %s6 = sld [smem:[#allocation0]]
  $region42: #{tpu_custom_call.1} parent=0
    _
  %s8 = ssub.s32 1, %s6
  %s9 = scalar_select 0, %s8, %s6
  $region1: #{tpu_custom_call.1} parent=0
    #allocation2 [shape = 'u8[512]{0}', space=vmem, size = 0x400, scoped, tag = 'input window, operand 0, single buffered']
    #allocation3 [shape = 's32[1]{0}', space=sflag, size = 0x4, scoped, tag = 'scoped memory for tpu_custom_call.1']
    #allocation4 [shape = 's32[1]{0}', space=sflag, size = 0x4, scoped, tag = 'scoped memory for tpu_custom_call.1']
    #allocation5 [shape = 'u8[131072]{0}', space=vmem, size = 0x20000, scoped, tag = 'input window, operand 1, single buffered']
    #allocation6 [shape = 's32[1]{0}', space=sflag, size = 0x4, scoped, tag = 'scoped memory for tpu_custom_call.1']
    #allocation7 [shape = 'u8[131072]{0}', space=vmem, size = 0x20000, scoped, tag = 'input window, operand 3, single buffered']
    #allocation8 [shape = 'u8[512]{0}', space=vmem, size = 0x400, scoped, tag = 'output window, operand 0, single buffered']
    %10 = vsyncpa [#allocation3], 0
    %11 = vsyncpa [#allocation6], 0
    %12 = vsyncpa [#allocation4], 0
    // Predicated region
    $region2: #{tpu_custom_call.1} parent=1 // pred_check
      _
    $region3: #{tpu_custom_call.1} parent=1 // pred_check_branch
      %14 = sbr.rel (0) target = $region5
    $region4: #{tpu_custom_call.1} parent=1 // pred_region
      %s16 = ssub.s32 16, 16
      %17 = vsyncadd [#allocation3], %s16
      %s19 = sshll.u32 [#allocation2], 4
      %s20 = int_to_ptr.vmem [resolvable:$true] %s19
      %22 = dma.hbm_to_vmem [thread:$0]  %s0, 16, %s20, [#allocation3]
    $region5: #{tpu_custom_call.1} parent=1 // pred_fallthru
      _
    // Predicated region
    $region6: #{tpu_custom_call.1} parent=1 // pred_check
      _
    $region7: #{tpu_custom_call.1} parent=1 // pred_check_branch
      %24 = sbr.rel (0) target = $region9
    $region8: #{tpu_custom_call.1} parent=1 // pred_region
      %s26 = ssub.s32 4096, 4096
      %27 = vsyncadd [#allocation6], %s26
      %s28 = sshll.u32 [#allocation5], 4
      %s29 = int_to_ptr.vmem [resolvable:$true] %s28
      %34 = dma.hbm_to_vmem [thread:$0]  %s1, 4096, %s29, [#allocation6], 256, 256, 16
    $region9: #{tpu_custom_call.1} parent=1 // pred_fallthru
      _
    // Predicated region
    $region10: #{tpu_custom_call.1} parent=1 // pred_check
      _
    $region11: #{tpu_custom_call.1} parent=1 // pred_check_branch
      %36 = sbr.rel (0) target = $region13
    $region12: #{tpu_custom_call.1} parent=1 // pred_region
      _
    $region13: #{tpu_custom_call.1} parent=1 // pred_fallthru
      _
    // Predicated region
    $region14: #{tpu_custom_call.1} parent=1 // pred_check
      _
    $region15: #{tpu_custom_call.1} parent=1 // pred_check_branch
      %38 = sbr.rel (0) target = $region17
    $region16: #{tpu_custom_call.1} parent=1 // pred_region
      %s40 = ssub.s32 4096, 4096
      %41 = vsyncadd [#allocation6], %s40
      %s42 = sshll.u32 [#allocation7], 4
      %s43 = int_to_ptr.vmem [resolvable:$true] %s42
      %48 = dma.hbm_to_vmem [thread:$0]  %s3, 4096, %s43, [#allocation6], 128, 128, 8
    $region17: #{tpu_custom_call.1} parent=1 // pred_fallthru
      _
    // Predicated region
    $region18: #{tpu_custom_call.1} parent=1 // pred_check
      _
    $region19: #{tpu_custom_call.1} parent=1 // pred_check_branch
      %50 = sbr.rel (0) target = $region21
    $region20: #{tpu_custom_call.1} parent=1 // pred_region
      _
    $region21: #{tpu_custom_call.1} parent=1 // pred_fallthru
      _
    // Predicated region
    $region22: #{tpu_custom_call.1} parent=1 // pred_check
      _
    $region23: #{tpu_custom_call.1} parent=1 // pred_check_branch
      %52 = sbr.rel (0) target = $region25
    $region24: #{tpu_custom_call.1} parent=1 // pred_region
      %53 = dma.done [#allocation3], 16
    $region25: #{tpu_custom_call.1} parent=1 // pred_fallthru
      _
    // Predicated region
    $region26: #{tpu_custom_call.1} parent=1 // pred_check
      _
    $region27: #{tpu_custom_call.1} parent=1 // pred_check_branch
      %55 = sbr.rel (0) target = $region29
    $region28: #{tpu_custom_call.1} parent=1 // pred_region
      %56 = dma.done [#allocation6], 4096
    $region29: #{tpu_custom_call.1} parent=1 // pred_fallthru
      _
    // Predicated region
    $region30: #{tpu_custom_call.1} parent=1 // pred_check
      _
    $region31: #{tpu_custom_call.1} parent=1 // pred_check_branch
      %58 = sbr.rel (0) target = $region33
    $region32: #{tpu_custom_call.1} parent=1 // pred_region
      %59 = dma.done [#allocation6], 4096
    $region33: #{tpu_custom_call.1} parent=1 // pred_fallthru
      _
    %v60 = vld [vmem:[#allocation2] sm:$0x1]
    %v61 = vld [vmem:[#allocation5] sm:$0xff]
    %v62 = vld [vmem:[#allocation5 + $0x8] sm:$0xff]
    %v63 = vld [vmem:[#allocation5 + $0x10] sm:$0xff]
    %v64 = vld [vmem:[#allocation5 + $0x18] sm:$0xff]
    %v65 = vld [vmem:[#allocation5 + $0x20] sm:$0xff]
    %v66 = vld [vmem:[#allocation5 + $0x28] sm:$0xff]
    %v67 = vld [vmem:[#allocation5 + $0x30] sm:$0xff]
    %v68 = vld [vmem:[#allocation5 + $0x38] sm:$0xff]
    %v69 = vld [vmem:[#allocation5 + $0x40] sm:$0xff]
    %v70 = vld [vmem:[#allocation5 + $0x48] sm:$0xff]
    %v71 = vld [vmem:[#allocation5 + $0x50] sm:$0xff]
    %v72 = vld [vmem:[#allocation5 + $0x58] sm:$0xff]
    %v73 = vld [vmem:[#allocation5 + $0x60] sm:$0xff]
    %v74 = vld [vmem:[#allocation5 + $0x68] sm:$0xff]
    %v75 = vld [vmem:[#allocation5 + $0x70] sm:$0xff]
    %v76 = vld [vmem:[#allocation5 + $0x78] sm:$0xff]
    %v77 = vld [vmem:[#allocation5 + $0x80] sm:$0xff]
    %v78 = vld [vmem:[#allocation5 + $0x88] sm:$0xff]
    %v79 = vld [vmem:[#allocation5 + $0x90] sm:$0xff]
    %v80 = vld [vmem:[#allocation5 + $0x98] sm:$0xff]
    %v81 = vld [vmem:[#allocation5 + $0xa0] sm:$0xff]
    %v82 = vld [vmem:[#allocation5 + $0xa8] sm:$0xff]
    %v83 = vld [vmem:[#allocation5 + $0xb0] sm:$0xff]
    %v84 = vld [vmem:[#allocation5 + $0xb8] sm:$0xff]
    %v85 = vld [vmem:[#allocation5 + $0xc0] sm:$0xff]
    %v86 = vld [vmem:[#allocation5 + $0xc8] sm:$0xff]
    %v87 = vld [vmem:[#allocation5 + $0xd0] sm:$0xff]
    %v88 = vld [vmem:[#allocation5 + $0xd8] sm:$0xff]
    %v89 = vld [vmem:[#allocation5 + $0xe0] sm:$0xff]
    %v90 = vld [vmem:[#allocation5 + $0xe8] sm:$0xff]
    %v91 = vld [vmem:[#allocation5 + $0xf0] sm:$0xff]
    %v92 = vld [vmem:[#allocation5 + $0xf8] sm:$0xff]
    %93 = vmatprep.subr.mxu0 %v62
    %94 = vmatpush1.msra.mxu0 %v61
    %95 = vmatprep.subr.mxu0 %v64
    %96 = vmatpush1.msra.mxu0 %v63
    %97 = vmatprep.subr.mxu0 %v66
    %98 = vmatpush1.msra.mxu0 %v65
    %99 = vmatprep.subr.mxu0 %v68
    %100 = vmatpush1.msra.mxu0 %v67
    %101 = vmatprep.subr.mxu0 %v70
    %102 = vmatpush1.msra.mxu0 %v69
    %103 = vmatprep.subr.mxu0 %v72
    %104 = vmatpush1.msra.mxu0 %v71
    %105 = vmatprep.subr.mxu0 %v74
    %106 = vmatpush1.msra.mxu0 %v73
    %107 = vmatprep.subr.mxu0 %v76
    %108 = vmatpush1.msra.mxu0 %v75
    %109 = vmatprep.subr.mxu0 %v78
    %110 = vmatpush1.msra.mxu0 %v77
    %111 = vmatprep.subr.mxu0 %v80
    %112 = vmatpush1.msra.mxu0 %v79
    %113 = vmatprep.subr.mxu0 %v82
    %114 = vmatpush1.msra.mxu0 %v81
    %115 = vmatprep.subr.mxu0 %v84
    %116 = vmatpush1.msra.mxu0 %v83
    %117 = vmatprep.subr.mxu0 %v86
    %118 = vmatpush1.msra.mxu0 %v85
    %119 = vmatprep.subr.mxu0 %v88
    %120 = vmatpush1.msra.mxu0 %v87
    %121 = vmatprep.subr.mxu0 %v90
    %122 = vmatpush1.msra.mxu0 %v89
    %123 = vmatprep.subr.mxu0 %v92
    %124 = vmatpush1.msra.mxu0 %v91
    %125 = vmatprep.subr.mxu0 0.0
    %126 = vmatpush1.msra.mxu0 0.0
    %127 = vmatprep.subr.mxu0 0.0
    %128 = vmatpush1.msra.mxu0 0.0
    %129 = vmatprep.subr.mxu0 0.0
    %130 = vmatpush1.msra.mxu0 0.0
    %131 = vmatprep.subr.mxu0 0.0
    %132 = vmatpush1.msra.mxu0 0.0
    %133 = vmatprep.subr.mxu0 0.0
    %134 = vmatpush1.msra.mxu0 0.0
    %135 = vmatprep.subr.mxu0 0.0
    %136 = vmatpush1.msra.mxu0 0.0
    %137 = vmatprep.subr.mxu0 0.0
    %138 = vmatpush1.msra.mxu0 0.0
    %139 = vmatprep.subr.mxu0 0.0
    %140 = vmatpush1.msra.mxu0 0.0
    %141 = vmatprep.subr.mxu0 0.0
    %142 = vmatpush1.msra.mxu0 0.0
    %143 = vmatprep.subr.mxu0 0.0
    %144 = vmatpush1.msra.mxu0 0.0
    %145 = vmatprep.subr.mxu0 0.0
    %146 = vmatpush1.msra.mxu0 0.0
    %147 = vmatprep.subr.mxu0 0.0
    %148 = vmatpush1.msra.mxu0 0.0
    %149 = vmatprep.subr.mxu0 0.0
    %150 = vmatpush1.msra.mxu0 0.0
    %151 = vmatprep.subr.mxu0 0.0
    %152 = vmatpush1.msra.mxu0 0.0
    %153 = vmatprep.subr.mxu0 0.0
    %154 = vmatpush1.msra.mxu0 0.0
    %155 = vmatprep.subr.mxu0 0.0
    %156 = vmatpush1.msra.mxu0 0.0
    %157 = vmatprep.mubr.f32.mxu0 0.0
    %158 = vmatmul.mubr.f32.gmra.mrb[0].mxu0 %v60
    %v159 = vpop.f32.mrb[0].mxu0
    %v160 = vadd.f32 0.0, %v159
    %v161 = vpop.f32.mrb[0].mxu0
    %v162 = vadd.f32 0.0, %v161
    %163 = vdwg.mxu0
    %v164 = vld [vmem:[%s2] sm:$0x3]
    %v166 = vlaneseq
    %v167 = vshrl.u32 %v166, 7
    %v168 = vsub.s32 0, %v167
    %v169 = vrot.slane %v164, %v168
    %v170 = vlaneseq
    %v171 = vshrl.u32 %v170, 7
    %v172 = vsub.s32 1, %v171
    %v173 = vrot.slane %v164, %v172
    %v176 = vsub.f32 %v160, %v169
    %v177 = vsub.f32 %v162, %v173
    %v178 = vmax.f32 %v176, 0.0
    %v179 = vmax.f32 %v177, 0.0
    %v180 = vld [vmem:[#allocation7] sm:$0xff]
    %v181 = vld [vmem:[#allocation7 + $0x8] sm:$0xff]
    %v182 = vld [vmem:[#allocation7 + $0x10] sm:$0xff]
    %v183 = vld [vmem:[#allocation7 + $0x18] sm:$0xff]
    %v184 = vld [vmem:[#allocation7 + $0x20] sm:$0xff]
    %v185 = vld [vmem:[#allocation7 + $0x28] sm:$0xff]
    %v186 = vld [vmem:[#allocation7 + $0x30] sm:$0xff]
    %v187 = vld [vmem:[#allocation7 + $0x38] sm:$0xff]
    %v188 = vld [vmem:[#allocation7 + $0x40] sm:$0xff]
    %v189 = vld [vmem:[#allocation7 + $0x48] sm:$0xff]
    %v190 = vld [vmem:[#allocation7 + $0x50] sm:$0xff]
    %v191 = vld [vmem:[#allocation7 + $0x58] sm:$0xff]
    %v192 = vld [vmem:[#allocation7 + $0x60] sm:$0xff]
    %v193 = vld [vmem:[#allocation7 + $0x68] sm:$0xff]
    %v194 = vld [vmem:[#allocation7 + $0x70] sm:$0xff]
    %v195 = vld [vmem:[#allocation7 + $0x78] sm:$0xff]
    %v196 = vld [vmem:[#allocation7 + $0x80] sm:$0xff]
    %v197 = vld [vmem:[#allocation7 + $0x88] sm:$0xff]
    %v198 = vld [vmem:[#allocation7 + $0x90] sm:$0xff]
    %v199 = vld [vmem:[#allocation7 + $0x98] sm:$0xff]
    %v200 = vld [vmem:[#allocation7 + $0xa0] sm:$0xff]
    %v201 = vld [vmem:[#allocation7 + $0xa8] sm:$0xff]
    %v202 = vld [vmem:[#allocation7 + $0xb0] sm:$0xff]
    %v203 = vld [vmem:[#allocation7 + $0xb8] sm:$0xff]
    %v204 = vld [vmem:[#allocation7 + $0xc0] sm:$0xff]
    %v205 = vld [vmem:[#allocation7 + $0xc8] sm:$0xff]
    %v206 = vld [vmem:[#allocation7 + $0xd0] sm:$0xff]
    %v207 = vld [vmem:[#allocation7 + $0xd8] sm:$0xff]
    %v208 = vld [vmem:[#allocation7 + $0xe0] sm:$0xff]
    %v209 = vld [vmem:[#allocation7 + $0xe8] sm:$0xff]
    %v210 = vld [vmem:[#allocation7 + $0xf0] sm:$0xff]
    %v211 = vld [vmem:[#allocation7 + $0xf8] sm:$0xff]
    %v212 = vld [vmem:[%s4] sm:$0x1]
    %213 = vmatprep.subr.mxu0 0.0
    %214 = vmatpush1.msra.mxu0 %v180
    %215 = vmatprep.subr.mxu0 0.0
    %216 = vmatpush1.msra.mxu0 %v181
    %217 = vmatprep.subr.mxu0 0.0
    %218 = vmatpush1.msra.mxu0 %v182
    %219 = vmatprep.subr.mxu0 0.0
    %220 = vmatpush1.msra.mxu0 %v183
    %221 = vmatprep.subr.mxu0 0.0
    %222 = vmatpush1.msra.mxu0 %v184
    %223 = vmatprep.subr.mxu0 0.0
    %224 = vmatpush1.msra.mxu0 %v185
    %225 = vmatprep.subr.mxu0 0.0
    %226 = vmatpush1.msra.mxu0 %v186
    %227 = vmatprep.subr.mxu0 0.0
    %228 = vmatpush1.msra.mxu0 %v187
    %229 = vmatprep.subr.mxu0 0.0
    %230 = vmatpush1.msra.mxu0 %v188
    %231 = vmatprep.subr.mxu0 0.0
    %232 = vmatpush1.msra.mxu0 %v189
    %233 = vmatprep.subr.mxu0 0.0
    %234 = vmatpush1.msra.mxu0 %v190
    %235 = vmatprep.subr.mxu0 0.0
    %236 = vmatpush1.msra.mxu0 %v191
    %237 = vmatprep.subr.mxu0 0.0
    %238 = vmatpush1.msra.mxu0 %v192
    %239 = vmatprep.subr.mxu0 0.0
    %240 = vmatpush1.msra.mxu0 %v193
    %241 = vmatprep.subr.mxu0 0.0
    %242 = vmatpush1.msra.mxu0 %v194
    %243 = vmatprep.subr.mxu0 0.0
    %244 = vmatpush1.msra.mxu0 %v195
    %245 = vmatprep.subr.mxu0 0.0
    %246 = vmatpush1.msra.mxu0 %v196
    %247 = vmatprep.subr.mxu0 0.0
    %248 = vmatpush1.msra.mxu0 %v197
    %249 = vmatprep.subr.mxu0 0.0
    %250 = vmatpush1.msra.mxu0 %v198
    %251 = vmatprep.subr.mxu0 0.0
    %252 = vmatpush1.msra.mxu0 %v199
    %253 = vmatprep.subr.mxu0 0.0
    %254 = vmatpush1.msra.mxu0 %v200
    %255 = vmatprep.subr.mxu0 0.0
    %256 = vmatpush1.msra.mxu0 %v201
    %257 = vmatprep.subr.mxu0 0.0
    %258 = vmatpush1.msra.mxu0 %v202
    %259 = vmatprep.subr.mxu0 0.0
    %260 = vmatpush1.msra.mxu0 %v203
    %261 = vmatprep.subr.mxu0 0.0
    %262 = vmatpush1.msra.mxu0 %v204
    %263 = vmatprep.subr.mxu0 0.0
    %264 = vmatpush1.msra.mxu0 %v205
    %265 = vmatprep.subr.mxu0 0.0
    %266 = vmatpush1.msra.mxu0 %v206
    %267 = vmatprep.subr.mxu0 0.0
    %268 = vmatpush1.msra.mxu0 %v207
    %269 = vmatprep.subr.mxu0 0.0
    %270 = vmatpush1.msra.mxu0 %v208
    %271 = vmatprep.subr.mxu0 0.0
    %272 = vmatpush1.msra.mxu0 %v209
    %273 = vmatprep.subr.mxu0 0.0
    %274 = vmatpush1.msra.mxu0 %v210
    %275 = vmatprep.subr.mxu0 0.0
    %276 = vmatpush1.msra.mxu0 %v211
    %277 = vmatprep.mubr.f32.mxu0 %v179
    %278 = vmatmul.mubr.f32.gmra.mrb[0].mxu0 %v178
    %v279 = vpop.f32.mrb[0].mxu0
    %v280 = vadd.f32 %v212, %v279
    %v281 = vpop.f32.mrb[0].mxu0
    %282 = vdwg.mxu0
    %v283 = vxor.u32 %v280, 2147483648
    %v284 = vmul.f32 %v283, 1.442695
    %v285 = vpow.pop %v284
    %v286 = vadd.f32 %v285, 1.0
    %v287 = vrcp.pop %v286
    %v288 = vmul.f32 1.0, %v287
    %289 = vst [vmem:[#allocation8] sm:$0x1] %v288
    // Predicated region
    $region34: #{tpu_custom_call.1} parent=1 // pred_check
      _
    $region35: #{tpu_custom_call.1} parent=1 // pred_check_branch
      %291 = sbr.rel (0) target = $region37
    $region36: #{tpu_custom_call.1} parent=1 // pred_region
      %s293 = ssub.s32 16, 16
      %294 = vsyncadd [#allocation4], %s293
      %s296 = sshll.u32 [#allocation8], 4
      %s297 = int_to_ptr.vmem [resolvable:$true] %s296
      %299 = dma.vmem_to_hbm [thread:$0]  %s297, 16, %s5, [#allocation4]
    $region37: #{tpu_custom_call.1} parent=1 // pred_fallthru
      _
    // Predicated region
    $region38: #{tpu_custom_call.1} parent=1 // pred_check
      _
    $region39: #{tpu_custom_call.1} parent=1 // pred_check_branch
      %301 = sbr.rel (0) target = $region41
    $region40: #{tpu_custom_call.1} parent=1 // pred_region
      %302 = dma.done [#allocation4], 16
    $region41: #{tpu_custom_call.1} parent=1 // pred_fallthru
      _
    %303 = vsyncpa [#allocation3], 1
    %304 = vsyncpa [#allocation6], 1
    %305 = vsyncpa [#allocation4], 1

</llo_original>
